<compile_context>
chip_gen: v7x
topology: tpu7x:2x2x1
jax: 0.10.0
libtpu: 0.0.40
codegen_flags: <defaults>
</compile_context>

<pallas_src>
import jax
import jax.numpy as jnp
from jax.experimental import pallas as pl
from jax.experimental.pallas import tpu as pltpu


def _cdiv(a, b):
    return -(-a // b)


def _round_up(a, m):
    return _cdiv(a, m) * m


def _multi_head_loss_kernel(x0_ref, y0_ref, m0_ref,
                            x1_ref, y1_ref, m1_ref,
                            out0_ref, out1_ref):
    j = pl.program_id(1)

    # Zero the resident per-split accumulators on the first reduction step.
    @pl.when(j == 0)
    def _():
        out0_ref[...] = jnp.zeros_like(out0_ref)
        out1_ref[...] = jnp.zeros_like(out1_ref)

    # ----- dataset 0: SoftTargetCrossEntropy (reduction='none'), folded form -----
    #   sum(-y * log_softmax(x)) == sum(y) * (max(x) + lse) - sum(y * x)
    x0 = x0_ref[...].astype(jnp.float32)
    y0 = y0_ref[...].astype(jnp.float32)
    m0 = m0_ref[...].astype(jnp.float32)                        # (T, 1)

    x0_max = jnp.max(x0, axis=-1, keepdims=True)                # (T, 1)
    lse = jnp.log(jnp.sum(jnp.exp(x0 - x0_max), axis=-1, keepdims=True))
    y0_sum = jnp.sum(y0, axis=-1, keepdims=True)
    y0x0 = jnp.sum(y0 * x0, axis=-1, keepdims=True)
    row0 = y0_sum * (x0_max + lse) - y0x0                       # (T, 1)
    part0 = jnp.sum(m0 * row0)                                  # masked partial sum

    # ----- dataset 1: BCEWithLogitsLoss (reduction='none') -> mean over classes -----
    x1 = x1_ref[...].astype(jnp.float32)
    y1 = y1_ref[...].astype(jnp.float32)
    m1 = m1_ref[...].astype(jnp.float32)                        # (T, 1)

    # numerically stable elementwise: max(x,0) - x*y + log(1 + exp(-|x|))
    elem = jnp.maximum(x1, 0.0) - x1 * y1 + jnp.log1p(jnp.exp(-jnp.abs(x1)))
    row1 = jnp.mean(elem, axis=-1, keepdims=True)               # (T, 1)
    part1 = jnp.sum(m1 * row1)

    # Accumulate f32 partial sums in the resident output blocks.
    out0_ref[...] += part0
    out1_ref[...] += part1


def multi_head_loss(preds, labels, masks, sigma_sqs, *, tile_b=512, num_splits=2):
    """preds/labels: dict dataset -> (B, C) (f32 or bf16); masks: dict dataset -> (B,)."""
    x0, y0, m0 = preds["ds0"], labels["ds0"], masks["ds0"]
    x1, y1, m1 = preds["ds1"], labels["ds1"], masks["ds1"]

    B, C0 = x0.shape
    _, C1 = x1.shape

    m0 = m0.reshape(B, 1).astype(jnp.float32)
    m1 = m1.reshape(B, 1).astype(jnp.float32)

    # ---- batch tiling: grid = (num_splits, tiles_per_split) ----
    # Avoid pointless splits / padding for small batches.
    num_splits = int(max(1, min(num_splits, _cdiv(B, 8))))

    bytes_per_row = 4 * (C0 + C1 + 2)                     # f32 worst case, all 6 inputs
    # Keep double-buffered input tiles under ~24 MiB (safe on v5e/v6e 128 MiB and
    # v7x 64 MiB VMEM per TC).
    tile_cap = max(8, (((24 << 20) // (2 * bytes_per_row)) // 8) * 8)
    rows_per_split = _cdiv(B, num_splits)
    tile_b_eff = min(tile_b, tile_cap, _round_up(rows_per_split, 8))
    tile_b_eff = max(8, (tile_b_eff // 8) * 8)
    tiles_per_split = _cdiv(rows_per_split, tile_b_eff)
    padded_b = num_splits * tiles_per_split * tile_b_eff

    def pad_rows(a):
        pad = padded_b - a.shape[0]
        return a if pad == 0 else jnp.pad(a, ((0, pad), (0, 0)))

    # Padded rows have zero labels and zero masks -> contribute exactly 0.
    x0p, y0p, m0p = pad_rows(x0), pad_rows(y0), pad_rows(m0)
    x1p, y1p, m1p = pad_rows(x1), pad_rows(y1), pad_rows(m1)

    def bmap(i, j):
        return (i * tiles_per_split + j, 0)

    def omap(i, j):
        return (i, 0, 0)

    in_specs = [
        pl.BlockSpec((tile_b_eff, C0), bmap),   # x0
        pl.BlockSpec((tile_b_eff, C0), bmap),   # y0
        pl.BlockSpec((tile_b_eff, 1), bmap),    # m0
        pl.BlockSpec((tile_b_eff, C1), bmap),   # x1
        pl.BlockSpec((tile_b_eff, C1), bmap),   # y1
        pl.BlockSpec((tile_b_eff, 1), bmap),    # m1
    ]
    out_specs = (
        pl.BlockSpec((1, 1, 1), omap),
        pl.BlockSpec((1, 1, 1), omap),
    )
    out_shape = (
        jax.ShapeDtypeStruct((num_splits, 1, 1), jnp.float32),
        jax.ShapeDtypeStruct((num_splits, 1, 1), jnp.float32),
    )

    vmem_limit = 2 * tile_b_eff * bytes_per_row + (8 << 20)
    vmem_limit = int(min(max(vmem_limit, 16 << 20), 48 << 20))

    cost = pl.CostEstimate(
        flops=int(6 * padded_b * (C0 + C1)),
        transcendentals=int(padded_b * (C0 + 2 * C1 + 1)),
        bytes_accessed=int(sum(a.size * a.dtype.itemsize
                               for a in (x0p, y0p, m0p, x1p, y1p, m1p)) + 8 * num_splits),
    )

    out0, out1 = pl.pallas_call(
        _multi_head_loss_kernel,
        out_shape=out_shape,
        grid_spec=pltpu.PrefetchScalarGridSpec(
            num_scalar_prefetch=0,
            grid=(num_splits, tiles_per_split),
            in_specs=in_specs,
            out_specs=out_specs,
        ),
        compiler_params=pltpu.CompilerParams(
            dimension_semantics=("parallel", "arbitrary"),
            vmem_limit_bytes=vmem_limit,
        ),
        cost_estimate=cost,
    )(x0p, y0p, m0p, x1p, y1p, m1p)

    # Tiny epilogue (applied exactly once): MTL uncertainty weighting + /batch_size.
    sigma = sigma_sqs.astype(jnp.float32)
    p0 = jnp.sum(out0)
    p1 = jnp.sum(out1)
    l0 = p0 / (2.0 * sigma[0]) + 0.5 * jnp.log(sigma[0])
    l1 = p1 / (2.0 * sigma[1]) + 0.5 * jnp.log(sigma[1])
    return (l0 + l1) / jnp.float32(B)


def multi_head_loss_ref(preds, labels, masks, sigma_sqs):
    """Pure-JAX reference matching the PyTorch forward."""
    x0, y0, m0 = preds["ds0"], labels["ds0"], masks["ds0"]
    x1, y1, m1 = preds["ds1"], labels["ds1"], masks["ds1"]

    loss0 = jnp.sum(-y0 * jax.nn.log_softmax(x0, axis=-1), axis=-1)     # (B,)
    loss0_sum = jnp.sum(m0 * loss0)

    elem = jnp.maximum(x1, 0.0) - x1 * y1 + jnp.log1p(jnp.exp(-jnp.abs(x1)))
    loss1 = jnp.mean(elem, axis=-1)                                     # (B,)
    loss1_sum = jnp.sum(m1 * loss1)

    l0 = loss0_sum / (2.0 * sigma_sqs[0]) + 0.5 * jnp.log(sigma_sqs[0])
    l1 = loss1_sum / (2.0 * sigma_sqs[1]) + 0.5 * jnp.log(sigma_sqs[1])
    return (l0 + l1) / x0.shape[0]


if __name__ == "__main__":
    B, C0, C1 = 8, 32, 16
    key = jax.random.PRNGKey(0)
    k0, k1, k2, k3, k4, k5, k6 = jax.random.split(key, 7)

    # dataset 0: soft (mixup-style) targets for soft_cross_entropy
    x0 = jax.random.normal(k0, (B, C0), dtype=jnp.float32)
    y0 = jax.nn.softmax(jax.random.normal(k1, (B, C0), dtype=jnp.float32), axis=-1)
    m0 = (jax.random.uniform(k2, (B,)) > 0.3).astype(jnp.float32)

    # dataset 1: multi-label targets in [0, 1] for bce_logit
    x1 = jax.random.normal(k3, (B, C1), dtype=jnp.float32)
    y1 = jax.random.uniform(k4, (B, C1), dtype=jnp.float32)
    m1 = (jax.random.uniform(k5, (B,)) > 0.3).astype(jnp.float32)

    # nn.Parameter dataset_sigma_sqs: shape (num_datasets,), uniform(0.2, 1.0)
    sigma_sqs = jax.random.uniform(k6, (2,), minval=0.2, maxval=1.0,
                                   dtype=jnp.float32)

    preds = {"ds0": x0, "ds1": x1}
    labels = {"ds0": y0, "ds1": y1}
    masks = {"ds0": m0, "ds1": m1}

    out = multi_head_loss(preds, labels, masks, sigma_sqs)
    out = jax.block_until_ready(out)

    ref = multi_head_loss_ref(preds, labels, masks, sigma_sqs)
    assert jnp.allclose(out, ref, rtol=1e-5, atol=1e-5), (out, ref)

    # TODO(synk): cross-projection heads (MULTI_ADD_CROSS_PROJ) and the other
    # _SOFT_TARGET_LOSSES variants are not instantiated in this synthetic config.
    print("KERNEL_OK")
</pallas_src>

<mosaic_0001>
module attributes {stable_mosaic.version = 11 : i64} {
  func.func @_multi_head_loss_kernel(%arg0: i32, %arg1: i32, %arg2: memref<8x32xf32, #tpu.memory_space<vmem>>, %arg3: memref<8x32xf32, #tpu.memory_space<vmem>>, %arg4: memref<8x1xf32, #tpu.memory_space<vmem>>, %arg5: memref<8x16xf32, #tpu.memory_space<vmem>>, %arg6: memref<8x16xf32, #tpu.memory_space<vmem>>, %arg7: memref<8x1xf32, #tpu.memory_space<vmem>>, %arg8: memref<1x1x1xf32, #tpu.memory_space<vmem>>, %arg9: memref<1x1x1xf32, #tpu.memory_space<vmem>>) attributes {dimension_semantics = [#tpu.dimension_semantics<parallel>, #tpu.dimension_semantics<arbitrary>], iteration_bounds = array<i64: 1, 1>, scalar_prefetch = 0 : i64, scratch_operands = 0 : i64, tpu.core_type = #tpu.core_type<tc>, window_params = [{transform_indices = @transform_0, window_bounds = array<i64: 8, 32>}, {transform_indices = @transform_1, window_bounds = array<i64: 8, 32>}, {transform_indices = @transform_2, window_bounds = array<i64: 8, 1>}, {transform_indices = @transform_3, window_bounds = array<i64: 8, 16>}, {transform_indices = @transform_4, window_bounds = array<i64: 8, 16>}, {transform_indices = @transform_5, window_bounds = array<i64: 8, 1>}, {transform_indices = @transform_6, window_bounds = array<i64: 1, 1, 1>}, {transform_indices = @transform_7, window_bounds = array<i64: 1, 1, 1>}]} {
    %c0_i32 = arith.constant 0 : i32
    %0 = arith.cmpi eq, %arg1, %c0_i32 : i32
    %1 = arith.extui %0 : i1 to i32
    %c0_i32_0 = arith.constant 0 : i32
    %2 = arith.cmpi ne, %1, %c0_i32_0 : i32
    scf.if %2 {
      %cst_33 = arith.constant 0.000000e+00 : f32
      %57 = vector.broadcast %cst_33 : f32 to vector<1x1x1xf32>
      %c0_34 = arith.constant 0 : index
      %c0_35 = arith.constant 0 : index
      %c0_36 = arith.constant 0 : index
      %58 = vector.load %arg8[%c0_34, %c0_35, %c0_36] : memref<1x1x1xf32, #tpu.memory_space<vmem>>, vector<1x1x1xf32>
      tpu.vector_store %arg8[%c0_34, %c0_35, %c0_36], %57 {strides = array<i32>} : memref<1x1x1xf32, #tpu.memory_space<vmem>>, vector<1x1x1xf32>,
      %cst_37 = arith.constant 0.000000e+00 : f32
      %59 = vector.broadcast %cst_37 : f32 to vector<1x1x1xf32>
      %c0_38 = arith.constant 0 : index
      %c0_39 = arith.constant 0 : index
      %c0_40 = arith.constant 0 : index
      %60 = vector.load %arg9[%c0_38, %c0_39, %c0_40] : memref<1x1x1xf32, #tpu.memory_space<vmem>>, vector<1x1x1xf32>
      tpu.vector_store %arg9[%c0_38, %c0_39, %c0_40], %59 {strides = array<i32>} : memref<1x1x1xf32, #tpu.memory_space<vmem>>, vector<1x1x1xf32>,
    } else {
    }
    %c0 = arith.constant 0 : index
    %c0_1 = arith.constant 0 : index
    %3 = vector.load %arg2[%c0, %c0_1] : memref<8x32xf32, #tpu.memory_space<vmem>>, vector<8x32xf32>
    %c0_2 = arith.constant 0 : index
    %c0_3 = arith.constant 0 : index
    %4 = vector.load %arg3[%c0_2, %c0_3] : memref<8x32xf32, #tpu.memory_space<vmem>>, vector<8x32xf32>
    %c0_4 = arith.constant 0 : index
    %c0_5 = arith.constant 0 : index
    %5 = vector.load %arg4[%c0_4, %c0_5] : memref<8x1xf32, #tpu.memory_space<vmem>>, vector<8x1xf32>
    %cst = arith.constant dense<0xFF800000> : vector<8xf32>
    %6 = vector.multi_reduction <maximumf>, %3, %cst [1] : vector<8x32xf32> to vector<8xf32>
    %7 = vector.shape_cast %6 : vector<8xf32> to vector<8x1xf32>
    %8 = vector.broadcast %7 : vector<8x1xf32> to vector<8x32xf32>
    %9 = arith.subf %3, %8 : vector<8x32xf32>
    %10 = math.exp %9 : vector<8x32xf32>
    %cst_6 = arith.constant dense<0.000000e+00> : vector<8xf32>
    %11 = vector.multi_reduction <add>, %10, %cst_6 [1] : vector<8x32xf32> to vector<8xf32>
    %12 = vector.shape_cast %11 : vector<8xf32> to vector<8x1xf32>
    %13 = math.log %12 : vector<8x1xf32>
    %cst_7 = arith.constant dense<0.000000e+00> : vector<8xf32>
    %14 = vector.multi_reduction <add>, %4, %cst_7 [1] : vector<8x32xf32> to vector<8xf32>
    %15 = vector.shape_cast %14 : vector<8xf32> to vector<8x1xf32>
    %16 = arith.mulf %4, %3 : vector<8x32xf32>
    %cst_8 = arith.constant dense<0.000000e+00> : vector<8xf32>
    %17 = vector.multi_reduction <add>, %16, %cst_8 [1] : vector<8x32xf32> to vector<8xf32>
    %18 = vector.shape_cast %17 : vector<8xf32> to vector<8x1xf32>
    %19 = arith.addf %7, %13 : vector<8x1xf32>
    %20 = arith.mulf %15, %19 : vector<8x1xf32>
    %21 = arith.subf %20, %18 : vector<8x1xf32>
    %22 = arith.mulf %5, %21 : vector<8x1xf32>
    %23 = vector.shape_cast %22 : vector<8x1xf32> to vector<1x8x1xf32>
    %cst_9 = arith.constant dense<0.000000e+00> : vector<1xf32>
    %24 = vector.multi_reduction <add>, %23, %cst_9 [1, 2] : vector<1x8x1xf32> to vector<1xf32>
    %25 = vector.shape_cast %24 : vector<1xf32> to vector<1x1x1xf32>
    %26 = vector.extract %25[0, 0, 0] : f32 from vector<1x1x1xf32>
    %c0_10 = arith.constant 0 : index
    %c0_11 = arith.constant 0 : index
    %27 = vector.load %arg5[%c0_10, %c0_11] : memref<8x16xf32, #tpu.memory_space<vmem>>, vector<8x16xf32>
    %c0_12 = arith.constant 0 : index
    %c0_13 = arith.constant 0 : index
    %28 = vector.load %arg6[%c0_12, %c0_13] : memref<8x16xf32, #tpu.memory_space<vmem>>, vector<8x16xf32>
    %c0_14 = arith.constant 0 : index
    %c0_15 = arith.constant 0 : index
    %29 = vector.load %arg7[%c0_14, %c0_15] : memref<8x1xf32, #tpu.memory_space<vmem>>, vector<8x1xf32>
    %cst_16 = arith.constant 0.000000e+00 : f32
    %30 = vector.broadcast %cst_16 : f32 to vector<8x16xf32>
    %31 = arith.maximumf %27, %30 : vector<8x16xf32>
    %32 = arith.mulf %27, %28 : vector<8x16xf32>
    %33 = arith.subf %31, %32 : vector<8x16xf32>
    %34 = math.absf %27 : vector<8x16xf32>
    %cst_17 = arith.constant 0.000000e+00 : f32
    %35 = vector.broadcast %cst_17 : f32 to vector<8x16xf32>
    %36 = arith.subf %35, %34 : vector<8x16xf32>
    %37 = math.exp %36 : vector<8x16xf32>
    %38 = math.log1p %37 : vector<8x16xf32>
    %39 = arith.addf %33, %38 : vector<8x16xf32>
    %cst_18 = arith.constant dense<0.000000e+00> : vector<8xf32>
    %40 = vector.multi_reduction <add>, %39, %cst_18 [1] : vector<8x16xf32> to vector<8xf32>
    %41 = vector.shape_cast %40 : vector<8xf32> to vector<8x1xf32>
    %cst_19 = arith.constant 1.600000e+01 : f32
    %42 = vector.broadcast %cst_19 : f32 to vector<8x1xf32>
    %43 = arith.divf %41, %42 : vector<8x1xf32>
    %44 = arith.mulf %29, %43 : vector<8x1xf32>
    %45 = vector.shape_cast %44 : vector<8x1xf32> to vector<1x8x1xf32>
    %cst_20 = arith.constant dense<0.000000e+00> : vector<1xf32>
    %46 = vector.multi_reduction <add>, %45, %cst_20 [1, 2] : vector<1x8x1xf32> to vector<1xf32>
    %47 = vector.shape_cast %46 : vector<1xf32> to vector<1x1x1xf32>
    %48 = vector.extract %47[0, 0, 0] : f32 from vector<1x1x1xf32>
    %c0_21 = arith.constant 0 : index
    %c0_22 = arith.constant 0 : index
    %c0_23 = arith.constant 0 : index
    %49 = vector.load %arg8[%c0_21, %c0_22, %c0_23] : memref<1x1x1xf32, #tpu.memory_space<vmem>>, vector<1x1x1xf32>
    %50 = vector.broadcast %26 : f32 to vector<1x1x1xf32>
    %51 = arith.addf %49, %50 : vector<1x1x1xf32>
    %c0_24 = arith.constant 0 : index
    %c0_25 = arith.constant 0 : index
    %c0_26 = arith.constant 0 : index
    %52 = vector.load %arg8[%c0_24, %c0_25, %c0_26] : memref<1x1x1xf32, #tpu.memory_space<vmem>>, vector<1x1x1xf32>
    tpu.vector_store %arg8[%c0_24, %c0_25, %c0_26], %51 {strides = array<i32>} : memref<1x1x1xf32, #tpu.memory_space<vmem>>, vector<1x1x1xf32>,
    %c0_27 = arith.constant 0 : index
    %c0_28 = arith.constant 0 : index
    %c0_29 = arith.constant 0 : index
    %53 = vector.load %arg9[%c0_27, %c0_28, %c0_29] : memref<1x1x1xf32, #tpu.memory_space<vmem>>, vector<1x1x1xf32>
    %54 = vector.broadcast %48 : f32 to vector<1x1x1xf32>
    %55 = arith.addf %53, %54 : vector<1x1x1xf32>
    %c0_30 = arith.constant 0 : index
    %c0_31 = arith.constant 0 : index
    %c0_32 = arith.constant 0 : index
    %56 = vector.load %arg9[%c0_30, %c0_31, %c0_32] : memref<1x1x1xf32, #tpu.memory_space<vmem>>, vector<1x1x1xf32>
    tpu.vector_store %arg9[%c0_30, %c0_31, %c0_32], %55 {strides = array<i32>} : memref<1x1x1xf32, #tpu.memory_space<vmem>>, vector<1x1x1xf32>,
    return
  }
  func.func @transform_0(%arg0: i32, %arg1: i32) -> (i32, i32) {
    %c1_i32 = arith.constant 1 : i32
    %0 = arith.muli %arg0, %c1_i32 : i32
    %1 = arith.addi %0, %arg1 : i32
    %c0_i32 = arith.constant 0 : i32
    %c0_i32_0 = arith.constant 0 : i32
    return %1, %c0_i32 : i32, i32
  }
  func.func @transform_1(%arg0: i32, %arg1: i32) -> (i32, i32) {
    %c1_i32 = arith.constant 1 : i32
    %0 = arith.muli %arg0, %c1_i32 : i32
    %1 = arith.addi %0, %arg1 : i32
    %c0_i32 = arith.constant 0 : i32
    %c0_i32_0 = arith.constant 0 : i32
    return %1, %c0_i32 : i32, i32
  }
  func.func @transform_2(%arg0: i32, %arg1: i32) -> (i32, i32) {
    %c1_i32 = arith.constant 1 : i32
    %0 = arith.muli %arg0, %c1_i32 : i32
    %1 = arith.addi %0, %arg1 : i32
    %c0_i32 = arith.constant 0 : i32
    %c0_i32_0 = arith.constant 0 : i32
    return %1, %c0_i32 : i32, i32
  }
  func.func @transform_3(%arg0: i32, %arg1: i32) -> (i32, i32) {
    %c1_i32 = arith.constant 1 : i32
    %0 = arith.muli %arg0, %c1_i32 : i32
    %1 = arith.addi %0, %arg1 : i32
    %c0_i32 = arith.constant 0 : i32
    %c0_i32_0 = arith.constant 0 : i32
    return %1, %c0_i32 : i32, i32
  }
  func.func @transform_4(%arg0: i32, %arg1: i32) -> (i32, i32) {
    %c1_i32 = arith.constant 1 : i32
    %0 = arith.muli %arg0, %c1_i32 : i32
    %1 = arith.addi %0, %arg1 : i32
    %c0_i32 = arith.constant 0 : i32
    %c0_i32_0 = arith.constant 0 : i32
    return %1, %c0_i32 : i32, i32
  }
  func.func @transform_5(%arg0: i32, %arg1: i32) -> (i32, i32) {
    %c1_i32 = arith.constant 1 : i32
    %0 = arith.muli %arg0, %c1_i32 : i32
    %1 = arith.addi %0, %arg1 : i32
    %c0_i32 = arith.constant 0 : i32
    %c0_i32_0 = arith.constant 0 : i32
    return %1, %c0_i32 : i32, i32
  }
  func.func @transform_6(%arg0: i32, %arg1: i32) -> (i32, i32, i32) {
    %c0_i32 = arith.constant 0 : i32
    %c0_i32_0 = arith.constant 0 : i32
    %c0_i32_1 = arith.constant 0 : i32
    return %arg0, %c0_i32, %c0_i32_0 : i32, i32, i32
  }
  func.func @transform_7(%arg0: i32, %arg1: i32) -> (i32, i32, i32) {
    %c0_i32 = arith.constant 0 : i32
    %c0_i32_0 = arith.constant 0 : i32
    %c0_i32_1 = arith.constant 0 : i32
    return %arg0, %c0_i32, %c0_i32_0 : i32, i32, i32
  }
}

</mosaic_0001>

<llo_original>
// kernel: tpu_custom_call.1
$region0: #{tpu_custom_call.1}
  #allocation0 [shape = 'u32[]', space=smem, size = 0x4, offset = 0x4, fixed_abs, tag = 'smem constant byte address 0x4 - core index']
  #allocation1 [shape = 'u32[144,128]{1,0:T(1,128)}', space=vmem, size = 0x12000, scoped, tag = 'internal scratch']
  %s0 = inlined_call_operand.vmem [shape: f32[8,32], index: 0, kind: input, shape index: {}]
  %s1 = inlined_call_operand.vmem [shape: f32[8,32], index: 1, kind: input, shape index: {}]
  %s2 = inlined_call_operand.vmem [shape: f32[8,1], index: 2, kind: input, shape index: {}]
  %s3 = inlined_call_operand.vmem [shape: f32[8,16], index: 3, kind: input, shape index: {}]
  %s4 = inlined_call_operand.vmem [shape: f32[8,16], index: 4, kind: input, shape index: {}]
  %s5 = inlined_call_operand.vmem [shape: f32[8,1], index: 5, kind: input, shape index: {}]
  %s6 = inlined_call_operand.hbm [shape: f32[1,1,1], index: 6, kind: output, shape index: {0}]
  %s7 = inlined_call_operand.hbm [shape: f32[1,1,1], index: 7, kind: output, shape index: {1}]
  %8 = xla_tuple %s6, %s7
  %s9 = sld [smem:[#allocation0]]
  $region46: #{tpu_custom_call.1} parent=0
    _
  %s11 = ssub.s32 1, %s9
  %s12 = scalar_select 0, %s11, %s9
  $region1: #{tpu_custom_call.1} parent=0
    #allocation2 [shape = 'u8[512]{0}', space=vmem, size = 0x400, scoped, tag = 'output window, operand 0, single buffered']
    #allocation3 [shape = 's32[1]{0}', space=sflag, size = 0x4, scoped, tag = 'scoped memory for tpu_custom_call.1']
    #allocation4 [shape = 'u8[512]{0}', space=vmem, size = 0x400, scoped, tag = 'output window, operand 1, single buffered']
    #allocation5 [shape = 's32[1]{0}', space=sflag, size = 0x4, scoped, tag = 'scoped memory for tpu_custom_call.1']
    %13 = vsyncpa [#allocation3], 0
    %14 = vsyncpa [#allocation5], 0
    // Predicated region
    $region2: #{tpu_custom_call.1} parent=1 // pred_check
      _
    $region3: #{tpu_custom_call.1} parent=1 // pred_check_branch
      %16 = sbr.rel (0) target = $region5
    $region4: #{tpu_custom_call.1} parent=1 // pred_region
      %s17 = sadd.s32 0, 0
      %p18 = scmp.lt.s32.totalorder %s17, 0
      %s19 = scalar_select %p18, %s17, 0
      %s20 = smul.addr %s19, 8
      %s21 = scalar_lea.vmem %s0, %s20
      %s22 = sadd.s32 0, 0
    $region5: #{tpu_custom_call.1} parent=1 // pred_fallthru
      _
    // Predicated region
    $region6: #{tpu_custom_call.1} parent=1 // pred_check
      _
    $region7: #{tpu_custom_call.1} parent=1 // pred_check_branch
      %24 = sbr.rel (0) target = $region9
    $region8: #{tpu_custom_call.1} parent=1 // pred_region
      %s25 = sadd.s32 0, 0
      %p26 = scmp.lt.s32.totalorder %s25, 0
      %s27 = scalar_select %p26, %s25, 0
      %s28 = smul.addr %s27, 8
      %s29 = scalar_lea.vmem %s1, %s28
      %s30 = sadd.s32 0, 0
    $region9: #{tpu_custom_call.1} parent=1 // pred_fallthru
      _
    // Predicated region
    $region10: #{tpu_custom_call.1} parent=1 // pred_check
      _
    $region11: #{tpu_custom_call.1} parent=1 // pred_check_branch
      %32 = sbr.rel (0) target = $region13
    $region12: #{tpu_custom_call.1} parent=1 // pred_region
      %s33 = sadd.s32 0, 0
      %p34 = scmp.lt.s32.totalorder %s33, 0
      %s35 = scalar_select %p34, %s33, 0
      %s36 = smul.addr %s35, 8
      %s37 = scalar_lea.vmem %s2, %s36
      %s38 = sadd.s32 0, 0
    $region13: #{tpu_custom_call.1} parent=1 // pred_fallthru
      _
    // Predicated region
    $region14: #{tpu_custom_call.1} parent=1 // pred_check
      _
    $region15: #{tpu_custom_call.1} parent=1 // pred_check_branch
      %40 = sbr.rel (0) target = $region17
    $region16: #{tpu_custom_call.1} parent=1 // pred_region
      %s41 = sadd.s32 0, 0
      %p42 = scmp.lt.s32.totalorder %s41, 0
      %s43 = scalar_select %p42, %s41, 0
      %s44 = smul.addr %s43, 8
      %s45 = scalar_lea.vmem %s3, %s44
      %s46 = sadd.s32 0, 0
    $region17: #{tpu_custom_call.1} parent=1 // pred_fallthru
      _
    // Predicated region
    $region18: #{tpu_custom_call.1} parent=1 // pred_check
      _
    $region19: #{tpu_custom_call.1} parent=1 // pred_check_branch
      %48 = sbr.rel (0) target = $region21
    $region20: #{tpu_custom_call.1} parent=1 // pred_region
      %s49 = sadd.s32 0, 0
      %p50 = scmp.lt.s32.totalorder %s49, 0
      %s51 = scalar_select %p50, %s49, 0
      %s52 = smul.addr %s51, 8
      %s53 = scalar_lea.vmem %s4, %s52
      %s54 = sadd.s32 0, 0
    $region21: #{tpu_custom_call.1} parent=1 // pred_fallthru
      _
    // Predicated region
    $region22: #{tpu_custom_call.1} parent=1 // pred_check
      _
    $region23: #{tpu_custom_call.1} parent=1 // pred_check_branch
      %56 = sbr.rel (0) target = $region25
    $region24: #{tpu_custom_call.1} parent=1 // pred_region
      %s57 = sadd.s32 0, 0
      %p58 = scmp.lt.s32.totalorder %s57, 0
      %s59 = scalar_select %p58, %s57, 0
      %s60 = smul.addr %s59, 8
      %s61 = scalar_lea.vmem %s5, %s60
      %s62 = sadd.s32 0, 0
    $region25: #{tpu_custom_call.1} parent=1 // pred_fallthru
      _
    %s63 = sadd.s32 0, 0
    %p64 = scmp.lt.s32.totalorder %s63, 0
    %s65 = scalar_select %p64, %s63, 0
    %s66 = smul.addr %s65, 8
    %s67 = scalar_lea.vmem %s0, %s66
    %s68 = sadd.s32 0, 0
    %p69 = scmp.lt.s32.totalorder %s68, 0
    %s70 = scalar_select %p69, %s68, 0
    %s71 = smul.addr %s70, 8
    %s72 = scalar_lea.vmem %s1, %s71
    %s73 = sadd.s32 0, 0
    %p74 = scmp.lt.s32.totalorder %s73, 0
    %s75 = scalar_select %p74, %s73, 0
    %s76 = smul.addr %s75, 8
    %s77 = scalar_lea.vmem %s2, %s76
    %s78 = sadd.s32 0, 0
    %p79 = scmp.lt.s32.totalorder %s78, 0
    %s80 = scalar_select %p79, %s78, 0
    %s81 = smul.addr %s80, 8
    %s82 = scalar_lea.vmem %s3, %s81
    %s83 = sadd.s32 0, 0
    %p84 = scmp.lt.s32.totalorder %s83, 0
    %s85 = scalar_select %p84, %s83, 0
    %s86 = smul.addr %s85, 8
    %s87 = scalar_lea.vmem %s4, %s86
    %s88 = sadd.s32 0, 0
    %p89 = scmp.lt.s32.totalorder %s88, 0
    %s90 = scalar_select %p89, %s88, 0
    %s91 = smul.addr %s90, 8
    %s92 = scalar_lea.vmem %s5, %s91
    %s93 = sadd.s32 0, 0
    %p94 = scmp.lt.s32.totalorder %s93, 0
    %s95 = scalar_select %p94, %s93, 0
    %s96 = smul.addr %s95, 8
    %s97 = scalar_lea.vmem %s0, %s96
    %s98 = sadd.s32 0, 0
    %s99 = sadd.s32 0, 0
    %p100 = scmp.lt.s32.totalorder %s99, 0
    %s101 = scalar_select %p100, %s99, 0
    %s102 = smul.addr %s101, 8
    %s103 = scalar_lea.vmem %s1, %s102
    %s104 = sadd.s32 0, 0
    %s105 = sadd.s32 0, 0
    %p106 = scmp.lt.s32.totalorder %s105, 0
    %s107 = scalar_select %p106, %s105, 0
    %s108 = smul.addr %s107, 8
    %s109 = scalar_lea.vmem %s2, %s108
    %s110 = sadd.s32 0, 0
    %s111 = sadd.s32 0, 0
    %p112 = scmp.lt.s32.totalorder %s111, 0
    %s113 = scalar_select %p112, %s111, 0
    %s114 = smul.addr %s113, 8
    %s115 = scalar_lea.vmem %s3, %s114
    %s116 = sadd.s32 0, 0
    %s117 = sadd.s32 0, 0
    %p118 = scmp.lt.s32.totalorder %s117, 0
    %s119 = scalar_select %p118, %s117, 0
    %s120 = smul.addr %s119, 8
    %s121 = scalar_lea.vmem %s4, %s120
    %s122 = sadd.s32 0, 0
    %s123 = sadd.s32 0, 0
    %p124 = scmp.lt.s32.totalorder %s123, 0
    %s125 = scalar_select %p124, %s123, 0
    %s126 = smul.addr %s125, 8
    %s127 = scalar_lea.vmem %s5, %s126
    %s128 = sadd.s32 0, 0
    %p129 = scmp.eq.s32.totalorder 0, 0
    // Predicated region
    $region26: #{tpu_custom_call.1} parent=1 // pred_check
      %p130 = pneg %p129
    $region27: #{tpu_custom_call.1} parent=1 // pred_check_branch
      %132 = sbr.rel (%p130) target = $region29
    $region28: #{tpu_custom_call.1} parent=1 // pred_region
      %vm133 = vcmask 0
      %134 = vst.msk [vmem:[#allocation2] sm:$0x1] %vm133, 0.0
      %135 = vst.msk [vmem:[#allocation4] sm:$0x1] %vm133, 0.0
    $region29: #{tpu_custom_call.1} parent=1 // pred_fallthru
      _
    %v136 = vld [vmem:[%s97] sm:$0xff]
    %v137 = vld [vmem:[%s103] sm:$0xff]
    %v138 = vld [vmem:[%s109] sm:$0xff]
    %vm139 = vcmask 261120
    %v140 = vsel %vm139, %v136, -inf
    %141 = vmax.xlane.f32.xlu0 %v140
    %v142 = vpop.xlane.xlu0 %141
    %v143 = vsub.f32 %v136, %v142
    %v144 = vmul.f32 %v143, 1.442695
    %v145 = vpow.pop %v144
    %v146 = vsel %vm139, %v145, 0.0
    %147 = vadd.xlane.f32.xlu0 %v146
    %v148 = vpop.xlane.xlu0 %147
    %v149 = vlog2.pop %v148
    %v150 = vmul.f32 %v149, 0.6931472
    %v151 = vsel %vm139, %v137, 0.0
    %152 = vadd.xlane.f32.xlu0 %v151
    %v153 = vpop.xlane.xlu0 %152
    %v154 = vmul.f32 %v137, %v136
    %v155 = vsel %vm139, %v154, 0.0
    %156 = vadd.xlane.f32.xlu0 %v155
    %v157 = vpop.xlane.xlu0 %156
    %v158 = vadd.f32 %v142, %v150
    %v159 = vmul.f32 %v153, %v158
    %v160 = vsub.f32 %v159, %v157
    %v161 = vmul.f32 %v138, %v160
    %vm162 = vcmask 7168
    %v163 = vsel %vm162, %v161, 0.0
    %164 = vadd.xlane.f32.xlu0 %v163
    %v165 = vpop.xlane.xlu0 %164
    %v166 = vrot.slane %v165, 4
    %v167 = vadd.f32 %v165, %v166
    %v168 = vrot.slane %v167, 2
    %v169 = vadd.f32 %v167, %v168
    %v170 = vrot.slane %v169, 1
    %v171 = vadd.f32 %v169, %v170
    %s172 = vtos %v171
    %v173 = vld [vmem:[%s115] sm:$0xff]
    %v174 = vld [vmem:[%s121] sm:$0xff]
    %v175 = vld [vmem:[%s127] sm:$0xff]
    %v176 = vmax.f32 %v173, 0.0
    %v177 = vmul.f32 %v173, %v174
    %v178 = vsub.f32 %v176, %v177
    %v179 = vand.u32 2147483647, %v173
    %v180 = vsub.f32 0.0, %v179
    %v181 = vmul.f32 %v180, 1.442695
    %v182 = vpow.pop %v181
    %v183 = vadd.f32 %v182, 1.0
    %v184 = vlog2.pop %v183
    %v185 = vmul.f32 %v184, 0.6931472
    %v186 = vmul.f32 -0.5, %v182
    %v187 = vadd.f32 %v186, 1.0
    %v188 = vmul.f32 %v187, %v182
    %v189 = vand.u32 2147483647, %v182
    %vm190 = vcmp.lt.f32.partialorder %v189, 0.0004427343
    %v191 = vsel %vm190, %v188, %v185
    %v192 = vadd.f32 %v178, %v191
    %vm193 = vcmask 130048
    %v194 = vsel %vm193, %v192, 0.0
    %195 = vadd.xlane.f32.xlu0 %v194
    %v196 = vpop.xlane.xlu0 %195
    %v197 = vrcp.pop 16.0
    %v198 = vmul.f32 %v196, %v197
    %v199 = vmul.f32 %v175, %v198
    %v200 = vsel %vm162, %v199, 0.0
    %201 = vadd.xlane.f32.xlu0 %v200
    %v202 = vpop.xlane.xlu0 %201
    %v203 = vrot.slane %v202, 4
    %v204 = vadd.f32 %v202, %v203
    %v205 = vrot.slane %v204, 2
    %v206 = vadd.f32 %v204, %v205
    %v207 = vrot.slane %v206, 1
    %v208 = vadd.f32 %v206, %v207
    %s209 = vtos %v208
    %v210 = vld [vmem:[#allocation2] sm:$0x1]
    %v211 = vstv %s172
    %v212 = vadd.f32 %v210, %v211
    %vm213 = vcmask 0
    %214 = vst.msk [vmem:[#allocation2] sm:$0x1] %vm213, %v212
    %v215 = vld [vmem:[#allocation4] sm:$0x1]
    %v216 = vstv %s209
    %v217 = vadd.f32 %v215, %v216
    %218 = vst.msk [vmem:[#allocation4] sm:$0x1] %vm213, %v217
    // Predicated region
    $region30: #{tpu_custom_call.1} parent=1 // pred_check
      _
    $region31: #{tpu_custom_call.1} parent=1 // pred_check_branch
      %220 = sbr.rel (0) target = $region33
    $region32: #{tpu_custom_call.1} parent=1 // pred_region
      %s222 = ssub.s32 16, 16
      %223 = vsyncadd [#allocation3], %s222
      %s225 = sshll.u32 [#allocation2], 4
      %s226 = int_to_ptr.vmem [resolvable:$true] %s225
      %228 = dma.vmem_to_hbm [thread:$0]  %s226, 16, %s6, [#allocation3]
    $region33: #{tpu_custom_call.1} parent=1 // pred_fallthru
      _
    // Predicated region
    $region34: #{tpu_custom_call.1} parent=1 // pred_check
      _
    $region35: #{tpu_custom_call.1} parent=1 // pred_check_branch
      %230 = sbr.rel (0) target = $region37
    $region36: #{tpu_custom_call.1} parent=1 // pred_region
      %s232 = ssub.s32 16, 16
      %233 = vsyncadd [#allocation5], %s232
      %s235 = sshll.u32 [#allocation4], 4
      %s236 = int_to_ptr.vmem [resolvable:$true] %s235
      %238 = dma.vmem_to_hbm [thread:$0]  %s236, 16, %s7, [#allocation5]
    $region37: #{tpu_custom_call.1} parent=1 // pred_fallthru
      _
    // Predicated region
    $region38: #{tpu_custom_call.1} parent=1 // pred_check
      _
    $region39: #{tpu_custom_call.1} parent=1 // pred_check_branch
      %240 = sbr.rel (0) target = $region41
    $region40: #{tpu_custom_call.1} parent=1 // pred_region
      %241 = dma.done [#allocation3], 16
    $region41: #{tpu_custom_call.1} parent=1 // pred_fallthru
      _
    // Predicated region
    $region42: #{tpu_custom_call.1} parent=1 // pred_check
      _
    $region43: #{tpu_custom_call.1} parent=1 // pred_check_branch
      %243 = sbr.rel (0) target = $region45
    $region44: #{tpu_custom_call.1} parent=1 // pred_region
      %244 = dma.done [#allocation5], 16
    $region45: #{tpu_custom_call.1} parent=1 // pred_fallthru
      _
    %245 = vsyncpa [#allocation3], 1
    %246 = vsyncpa [#allocation5], 1

</llo_original>
